<compile_context>
chip_gen: v7x
topology: tpu7x:2x2x1
jax: 0.10.0
libtpu: 0.0.40
codegen_flags: <defaults>
</compile_context>

<pallas_src>
import jax
import jax.numpy as jnp
from jax.experimental import pallas as pl
from jax.experimental.pallas import tpu as pltpu


def _linear_kernel(x_ref, w_ref, b_ref, o_ref):
    # x_ref: (TB, D) VMEM, w_ref: (1, D) VMEM, b_ref: (1, 1) SMEM, o_ref: (TB, 1)
    x = x_ref[...].astype(jnp.float32)          # (TB, D)
    w = w_ref[...].astype(jnp.float32)          # (1, D), broadcasts over sublanes
    b = b_ref[0, 0]                             # scalar from SMEM
    acc = jnp.sum(x * w, axis=-1, keepdims=True) + b   # VPU mul + XLU lane reduce, f32
    o_ref[...] = acc.astype(o_ref.dtype)


def _round_up(n, m):
    return ((n + m - 1) // m) * m


_VMEM_LIMIT_BYTES = 48 * 1024 * 1024      # headroom under v7x's 64 MiB physical VMEM
_VMEM_TILE_BUDGET = 40 * 1024 * 1024      # what the tile chooser is allowed to spend
_TARGET_X_TILE_BYTES = 8 * 1024 * 1024    # ~8 MiB x tile amortizes ~0.35us/step overhead
_MIN_PALLAS_BYTES = 512 * 1024            # below this, plain jnp is cheaper than a launch


def _choose_batch_tile(batch, dim):
    """Batch tile (multiple of 8) sized against real (lane-padded, double-buffered) VMEM."""
    d_pad = _round_up(dim, 128)
    x_row_bytes = 4 * d_pad                 # f32 row, lane-padded to 128
    out_row_bytes = 4 * 128                 # (TB, 1) out block lane-pads each row to 128
    per_row = 2 * (x_row_bytes + out_row_bytes)   # x2: double-buffered input + output

    tb = _VMEM_TILE_BUDGET // per_row
    tb = min(tb, max(1, _TARGET_X_TILE_BYTES // x_row_bytes))
    if batch >= 16:
        # Ensure at least 2 grid blocks so the "parallel" axis can use both v7x TCs.
        tb = min(tb, _round_up((batch + 1) // 2, 8))
    tb = min(tb, _round_up(batch, 8))
    tb = max(8, (tb // 8) * 8)
    return tb


def linear_regression_forward(x, weight, bias, *, force_pallas=False):
    """x: (B, D); weight: (1, D) (PyTorch nn.Linear layout); bias: (1,) -> (B, 1)."""
    B, D = x.shape
    d_pad = _round_up(D, 128)

    # Tiny-problem fallback: pallas_call fixed overhead dominates such shapes.
    if not force_pallas and B * 4 * d_pad < _MIN_PALLAS_BYTES:
        return (x @ weight.T + bias.reshape(1, 1)).astype(x.dtype)

    # Note: for very large B with D << 128 one could fold k rows into lanes
    # (reshape (B, D) -> (B//k, k*D), tile w k times, segmented lane reduce) to
    # recover the (128 - D)/128 vreg/DMA padding; not needed for these shapes.

    TB = _choose_batch_tile(B, D)
    n_blocks = pl.cdiv(B, TB)               # ragged last block handled by Pallas masking
    b2 = bias.reshape(1, 1).astype(jnp.float32)

    return pl.pallas_call(
        _linear_kernel,
        out_shape=jax.ShapeDtypeStruct((B, 1), x.dtype),
        grid_spec=pltpu.PrefetchScalarGridSpec(
            num_scalar_prefetch=0,
            grid=(n_blocks,),
            in_specs=[
                pl.BlockSpec((TB, D), lambda i: (i, 0)),                   # x batch tile
                pl.BlockSpec((1, D), lambda i: (0, 0)),                    # weight, resident
                pl.BlockSpec(memory_space=pltpu.MemorySpace.SMEM),         # bias scalar
            ],
            out_specs=pl.BlockSpec((TB, 1), lambda i: (i, 0)),
        ),
        compiler_params=pltpu.CompilerParams(
            dimension_semantics=("parallel",),
            vmem_limit_bytes=_VMEM_LIMIT_BYTES,
        ),
        cost_estimate=pl.CostEstimate(
            flops=2 * B * D,
            transcendentals=0,
            bytes_accessed=4 * (B * D + D + B),
        ),
    )(x, weight, b2)


if __name__ == "__main__":
    key = jax.random.PRNGKey(0)
    k_x, k_w, k_b, k_x2 = jax.random.split(key, 4)

    # Case 1: module-spec small shape, forced through the Pallas path.
    batch, input_dim = 8, 32
    bound = 1.0 / jnp.sqrt(input_dim)
    weight = jax.random.uniform(k_w, (1, input_dim), jnp.float32, -bound, bound)
    bias = jax.random.uniform(k_b, (1,), jnp.float32, -bound, bound)
    x = jax.random.normal(k_x, (batch, input_dim), jnp.float32)

    out = jax.block_until_ready(
        linear_regression_forward(x, weight, bias, force_pallas=True))
    ref = x @ weight.T + bias
    assert out.shape == (batch, 1)
    assert jnp.allclose(out, ref, atol=1e-5, rtol=1e-5)

    # Case 2: medium, ragged batch (B % TB != 0) -> multi-block grid with a
    # masked last block and no wrapper-side padding copy of x.
    batch2, input_dim2 = 1037, 160
    bound2 = 1.0 / jnp.sqrt(input_dim2)
    weight2 = jax.random.uniform(k_w, (1, input_dim2), jnp.float32, -bound2, bound2)
    bias2 = jax.random.uniform(k_b, (1,), jnp.float32, -bound2, bound2)
    x2 = jax.random.normal(k_x2, (batch2, input_dim2), jnp.float32)

    out2 = jax.block_until_ready(linear_regression_forward(x2, weight2, bias2))
    ref2 = x2 @ weight2.T + bias2
    assert out2.shape == (batch2, 1)
    assert jnp.allclose(out2, ref2, atol=1e-4, rtol=1e-4)

    print("KERNEL_OK")
</pallas_src>

<mosaic_0001>
module attributes {stable_mosaic.version = 11 : i64} {
  func.func @_linear_kernel(%arg0: i32, %arg1: memref<8x32xf32, #tpu.memory_space<vmem>>, %arg2: memref<1x32xf32, #tpu.memory_space<vmem>>, %arg3: memref<1x1xf32, #tpu.memory_space<smem>>, %arg4: memref<8x1xf32, #tpu.memory_space<vmem>>) attributes {dimension_semantics = [#tpu.dimension_semantics<parallel>], iteration_bounds = array<i64: 1>, scalar_prefetch = 0 : i64, scratch_operands = 0 : i64, tpu.core_type = #tpu.core_type<tc>, window_params = [{transform_indices = @transform_0, window_bounds = array<i64: 8, 32>}, {pipeline_mode = #tpu.pipeline_mode<synchronous>, transform_indices = @transform_1, window_bounds = array<i64: 1, 32>}, {transform_indices = @transform_2, window_bounds = array<i64: 1, 1>}, {transform_indices = @transform_3, window_bounds = array<i64: 8, 1>}]} {
    %c0 = arith.constant 0 : index
    %c0_0 = arith.constant 0 : index
    %0 = vector.load %arg1[%c0, %c0_0] : memref<8x32xf32, #tpu.memory_space<vmem>>, vector<8x32xf32>
    %c0_1 = arith.constant 0 : index
    %c0_2 = arith.constant 0 : index
    %1 = vector.load %arg2[%c0_1, %c0_2] : memref<1x32xf32, #tpu.memory_space<vmem>>, vector<1x32xf32>
    %c0_3 = arith.constant 0 : index
    %c0_4 = arith.constant 0 : index
    %2 = memref.load %arg3[%c0_3, %c0_4] : memref<1x1xf32, #tpu.memory_space<smem>>
    %3 = vector.broadcast %1 : vector<1x32xf32> to vector<8x32xf32>
    %4 = arith.mulf %0, %3 : vector<8x32xf32>
    %cst = arith.constant dense<0.000000e+00> : vector<8xf32>
    %5 = vector.multi_reduction <add>, %4, %cst [1] : vector<8x32xf32> to vector<8xf32>
    %6 = vector.shape_cast %5 : vector<8xf32> to vector<8x1xf32>
    %7 = vector.broadcast %2 : f32 to vector<8x1xf32>
    %8 = arith.addf %6, %7 : vector<8x1xf32>
    %c0_5 = arith.constant 0 : index
    %c0_6 = arith.constant 0 : index
    %9 = vector.load %arg4[%c0_5, %c0_6] : memref<8x1xf32, #tpu.memory_space<vmem>>, vector<8x1xf32>
    tpu.vector_store %arg4[%c0_5, %c0_6], %8 {strides = array<i32>} : memref<8x1xf32, #tpu.memory_space<vmem>>, vector<8x1xf32>,
    return
  }
  func.func @transform_0(%arg0: i32) -> (i32, i32) {
    %c0_i32 = arith.constant 0 : i32
    %c0_i32_0 = arith.constant 0 : i32
    return %arg0, %c0_i32 : i32, i32
  }
  func.func @transform_1(%arg0: i32) -> (i32, i32) {
    %c0_i32 = arith.constant 0 : i32
    %c0_i32_0 = arith.constant 0 : i32
    %c0_i32_1 = arith.constant 0 : i32
    return %c0_i32, %c0_i32_0 : i32, i32
  }
  func.func @transform_2(%arg0: i32) -> (i32, i32) {
    %c0_i32 = arith.constant 0 : i32
    %c0_i32_0 = arith.constant 0 : i32
    %c0_i32_1 = arith.constant 0 : i32
    return %c0_i32, %c0_i32_0 : i32, i32
  }
  func.func @transform_3(%arg0: i32) -> (i32, i32) {
    %c0_i32 = arith.constant 0 : i32
    %c0_i32_0 = arith.constant 0 : i32
    return %arg0, %c0_i32 : i32, i32
  }
}

</mosaic_0001>

<llo_original>
// kernel: tpu_custom_call.1
$region0: #{tpu_custom_call.1}
  #allocation0 [shape = 'u32[]', space=smem, size = 0x4, offset = 0x4, fixed_abs, tag = 'smem constant byte address 0x4 - core index']
  #allocation1 [shape = 'u32[144,128]{1,0:T(1,128)}', space=vmem, size = 0x12000, scoped, tag = 'internal scratch']
  #allocation2 [shape = 'f32[1,1]{1,0:T(1,128)S(6)}', space=smem, size = 0x200, scoped, tag = 'scoped memory for tpu_custom_call.1']
  %s0 = inlined_call_operand.hbm [shape: f32[8,32], index: 0, kind: input, shape index: {}]
  %s1 = inlined_call_operand.vmem [shape: f32[1,32], index: 1, kind: input, shape index: {}]
  %s2 = inlined_call_operand.<no memory space> [shape: f32[1,1], index: 2, kind: input, shape index: {}]
  %s3 = inlined_call_operand.vmem [shape: f32[8,1], index: 3, kind: output, shape index: {}]
  %s4 = sld [smem:[#allocation0]]
  $region26: #{tpu_custom_call.1} parent=0
    _
  %s6 = ssub.s32 1, %s4
  %s7 = scalar_select 0, %s6, %s4
  %8 = sst [smem:[#allocation2]] %s2
  $region1: #{tpu_custom_call.1} parent=0
    #allocation3 [shape = 'u8[4096]{0}', space=vmem, size = 0x1000, scoped, tag = 'input window, operand 0, single buffered']
    #allocation4 [shape = 's32[1]{0}', space=sflag, size = 0x4, scoped, tag = 'scoped memory for tpu_custom_call.1']
    %9 = vsyncpa [#allocation4], 0
    // Predicated region
    $region2: #{tpu_custom_call.1} parent=1 // pred_check
      _
    $region3: #{tpu_custom_call.1} parent=1 // pred_check_branch
      %11 = sbr.rel (0) target = $region5
    $region4: #{tpu_custom_call.1} parent=1 // pred_region
      %s13 = ssub.s32 128, 128
      %14 = vsyncadd [#allocation4], %s13
      %s16 = sshll.u32 [#allocation3], 4
      %s17 = int_to_ptr.vmem [resolvable:$true] %s16
      %19 = dma.hbm_to_vmem [thread:$0]  %s0, 128, %s17, [#allocation4]
    $region5: #{tpu_custom_call.1} parent=1 // pred_fallthru
      _
    // Predicated region
    $region6: #{tpu_custom_call.1} parent=1 // pred_check
      _
    $region7: #{tpu_custom_call.1} parent=1 // pred_check_branch
      %21 = sbr.rel (0) target = $region9
    $region8: #{tpu_custom_call.1} parent=1 // pred_region
      _
    $region9: #{tpu_custom_call.1} parent=1 // pred_fallthru
      _
    // Predicated region
    $region10: #{tpu_custom_call.1} parent=1 // pred_check
      _
    $region11: #{tpu_custom_call.1} parent=1 // pred_check_branch
      %23 = sbr.rel (0) target = $region13
    $region12: #{tpu_custom_call.1} parent=1 // pred_region
      _
    $region13: #{tpu_custom_call.1} parent=1 // pred_fallthru
      _
    // Predicated region
    $region14: #{tpu_custom_call.1} parent=1 // pred_check
      _
    $region15: #{tpu_custom_call.1} parent=1 // pred_check_branch
      %25 = sbr.rel (0) target = $region17
    $region16: #{tpu_custom_call.1} parent=1 // pred_region
      %26 = dma.done [#allocation4], 128
    $region17: #{tpu_custom_call.1} parent=1 // pred_fallthru
      _
    %v27 = vld [vmem:[#allocation3] sm:$0xff]
    %v28 = vld [vmem:[%s1] sm:$0x1]
    %s29 = sld [smem:[#allocation2]]
    %v31 = vlaneseq
    %v32 = vshrl.u32 %v31, 7
    %v33 = vsub.s32 0, %v32
    %v34 = vrot.slane %v28, %v33
    %v36 = vmul.f32 %v27, %v34
    %vm37 = vcmask 261120
    %v38 = vsel %vm37, %v36, 0.0
    %39 = vadd.xlane.f32.xlu0 %v38
    %v40 = vpop.xlane.xlu0 %39
    %v41 = vstv %s29
    %v42 = vadd.f32 %v40, %v41
    %vm43 = vcmask 7168
    %44 = vst.msk [vmem:[%s3] sm:$0xff] %vm43, %v42
    // Predicated region
    $region18: #{tpu_custom_call.1} parent=1 // pred_check
      _
    $region19: #{tpu_custom_call.1} parent=1 // pred_check_branch
      %46 = sbr.rel (0) target = $region21
    $region20: #{tpu_custom_call.1} parent=1 // pred_region
      _
    $region21: #{tpu_custom_call.1} parent=1 // pred_fallthru
      _
    // Predicated region
    $region22: #{tpu_custom_call.1} parent=1 // pred_check
      _
    $region23: #{tpu_custom_call.1} parent=1 // pred_check_branch
      %48 = sbr.rel (0) target = $region25
    $region24: #{tpu_custom_call.1} parent=1 // pred_region
      _
    $region25: #{tpu_custom_call.1} parent=1 // pred_fallthru
      _
    %49 = vsyncpa [#allocation4], 1

</llo_original>
